<compile_context>
chip_gen: v6e
topology: v6e:2x2x1
jax: 0.10.0
libtpu: 0.0.40
codegen_flags: <defaults>
</compile_context>

<pallas_src>
import functools

import jax
import jax.numpy as jnp
from jax.experimental import pallas as pl
from jax.experimental.pallas import tpu as pltpu


def _round_up(x, m):
    return -(-x // m) * m


def _pick_vmem_limit():
    """Per-generation VMEM budget (v5e/v6e: 96 MiB, v7x: 48 MiB)."""
    try:
        cap = int(pltpu.get_tpu_info().vmem_capacity_bytes)
    except Exception:
        cap = 64 * 1024 * 1024        # conservative fallback (v7x physical)
    return min(96 * 1024 * 1024, (3 * cap) // 4)


def _pick_spatial_tile(hw, kp, cp, budget):
    """Largest spatial tile (multiple of 8, <=2048 rows) fitting the VMEM budget."""
    per_row = 4 * kp + 8 * cp          # double-buffered bf16 im2col / P / z1 rows
    fixed = 2 * kp * cp + (1 << 16)    # single-buffered weight scratch + slack
    ts = max(8, min(2048, (budget - fixed) // per_row))
    ts = (ts // 8) * 8
    hw8 = _round_up(hw, 8)
    if ts >= hw8:
        return hw8, hw8                # whole image in one tile
    return ts, _round_up(hw, ts)


def _stage1_kernel(x_ref, p_ref, w_hbm, bns_ref, bnb_ref, z1_ref, sum_ref,
                   w_vmem, w_sem, *, n_valid):
    """im2col conv (one MXU matmul) + (+P) + [SA==1 -> *2 folded] ReLU + BN;
    accumulates per-channel sums for the global average pool."""
    t = pl.program_id(1)

    # Constant conv weight: DMA once per batch element into a single-buffered
    # VMEM scratch (avoids BlockSpec double-buffering of 9*Cp^2 bytes).
    @pl.when(t == 0)
    def _():
        copy = pltpu.make_async_copy(w_hbm, w_vmem, w_sem.at[0])
        copy.start()
        copy.wait()

    # All 9 conv taps in a single matmul: (TS, Kp) @ (Kp, Cp).
    acc = jnp.dot(x_ref[0], w_vmem[...], preferred_element_type=jnp.float32)
    s = acc + p_ref[0].astype(jnp.float32)
    # SA softmax over a single channel == 1  =>  relu(sa*s + s) == 2*relu(s);
    # the factor 2 is pre-folded into bns.
    z1 = jnp.maximum(s, 0.0) * bns_ref[...] + bnb_ref[...]

    if n_valid is not None:            # mask spatial padding rows (trace-time const)
        tsz = z1.shape[0]
        row = t * tsz + jax.lax.broadcasted_iota(jnp.int32, (tsz, 1), 0)
        z1 = jnp.where(row < n_valid, z1, 0.0)

    z1_ref[0] = z1.astype(z1_ref.dtype)

    tile_sum = jnp.sum(z1, axis=0, keepdims=True)      # (1, Cp) f32

    @pl.when(t == 0)
    def _():
        sum_ref[0] = tile_sum

    @pl.when(t != 0)
    def _():
        sum_ref[0] = sum_ref[0] + tile_sum


def _stage2_kernel(z1_ref, a_ref, bns_ref, bnb_ref, o_ref):
    """(1 + ca) * z1 -> ReLU -> BN; purely elementwise, fully parallel grid."""
    z1 = z1_ref[0].astype(jnp.float32)                 # (TS, Cp)
    y = jnp.maximum(z1 * a_ref[0], 0.0) * bns_ref[...] + bnb_ref[...]
    o_ref[0] = y.astype(o_ref.dtype)


def botblock_sa_ca(N, P, conv3_w, sa_w1, sa_b1, sa_w2, sa_b2, ca_w, ca_b,
                   gamma, beta, run_mean, run_var, eps=1e-5, spatial_tile=None):
    """Pallas forward of Botblock_SA_CA (eval-mode BatchNorm).

    N: (B, Cin, H, W) NCHW, P: (B, Cout, H//2, W//2) NCHW.  The module's forward
    only type-checks when in_planes == out_planes.  The SA-branch parameters are
    accepted for interface fidelity but are mathematically inert (softmax over a
    size-1 channel dim is identically 1).
    """
    del sa_w1, sa_b1, sa_w2, sa_b2     # exact no-ops, see docstring

    B, Cin, H, W = N.shape
    Bp, Ch, Ho, Wo = P.shape
    assert B == Bp and Cin == Ch, "forward requires in_planes == out_planes"
    assert H % 2 == 0 and W % 2 == 0 and Ho == H // 2 and Wo == W // 2

    f32, bf16 = jnp.float32, jnp.bfloat16
    hw = Ho * Wo
    Cp = _round_up(Ch, 128)            # lane-dense output channels
    Kp = _round_up(9 * Cin, 128)       # im2col contraction dim

    vmem_limit = _pick_vmem_limit()
    if spatial_tile is None:
        ts, hw_pad = _pick_spatial_tile(hw, Kp, Cp, (7 * vmem_limit) // 10)
    else:
        ts = max(8, (int(spatial_tile) // 8) * 8)
        hw_pad = _round_up(hw, ts)
    n_tiles = hw_pad // ts
    n_valid = None if hw_pad == hw else hw

    # ---- im2col: the 9 conv taps concatenated along lanes, spatial flattened.
    x = jnp.transpose(N, (0, 2, 3, 1)).astype(bf16)            # NHWC
    x = jnp.pad(x, ((0, 0), (1, 1), (1, 1), (0, 0)))           # ring pad 1
    taps = [x[:, dy:dy + 2 * Ho:2, dx:dx + 2 * Wo:2, :]
            for dy in range(3) for dx in range(3)]             # 9 x (B,Ho,Wo,Cin)
    xcol = jnp.concatenate(taps, axis=-1).reshape(B, hw, 9 * Cin)
    xcol = jnp.pad(xcol, ((0, 0), (0, hw_pad - hw), (0, Kp - 9 * Cin)))

    # ---- P: NCHW -> flattened channels-last bf16.
    p_fl = jnp.transpose(P, (0, 2, 3, 1)).astype(bf16).reshape(B, hw, Ch)
    p_fl = jnp.pad(p_fl, ((0, 0), (0, hw_pad - hw), (0, Cp - Ch)))

    # ---- conv weight as one (Kp, Cp) bf16 matrix; rows ordered (dy,dx)-major,
    #      cin-minor to match the im2col lane order.
    w = jnp.transpose(conv3_w, (2, 3, 1, 0)).reshape(9 * Cin, Ch)
    w = jnp.pad(w, ((0, Kp - 9 * Cin), (0, Cp - Ch))).astype(bf16)

    # ---- eval-mode BatchNorm folded to scale/bias; the SA branch's exact *2 is
    #      folded into the stage-1 scale.  Padded channels: scale = bias = 0.
    bn_scale = gamma.astype(f32) / jnp.sqrt(run_var.astype(f32) + eps)
    bn_bias = beta.astype(f32) - run_mean.astype(f32) * bn_scale

    def _padc(v):
        return jnp.pad(v.astype(f32), (0, Cp - Ch)).reshape(1, Cp)

    bns1, bns2, bnb = _padc(2.0 * bn_scale), _padc(bn_scale), _padc(bn_bias)

    x_spec = pl.BlockSpec((1, ts, Kp), lambda b, t: (b, t, 0))
    act_spec = pl.BlockSpec((1, ts, Cp), lambda b, t: (b, t, 0))
    vec_spec = pl.BlockSpec((1, Cp), lambda b, t: (0, 0))
    bvec_spec = pl.BlockSpec((1, 1, Cp), lambda b, t: (b, 0, 0))
    grid = (B, n_tiles)

    # ---- pass 1: conv(+P) + SA(*2) + ReLU + BN, cross-tile pooled-sum accumulation.
    z1, sums = pl.pallas_call(
        functools.partial(_stage1_kernel, n_valid=n_valid),
        out_shape=(jax.ShapeDtypeStruct((B, hw_pad, Cp), bf16),
                   jax.ShapeDtypeStruct((B, 1, Cp), f32)),
        grid_spec=pltpu.PrefetchScalarGridSpec(
            num_scalar_prefetch=0,
            grid=grid,
            in_specs=[x_spec, act_spec,
                      pl.BlockSpec(memory_space=pl.ANY),   # conv weight stays in HBM
                      vec_spec, vec_spec],                 # 2*scale, bias
            out_specs=[act_spec, bvec_spec],
            scratch_shapes=[pltpu.VMEM((Kp, Cp), bf16),
                            pltpu.SemaphoreType.DMA((1,))]),
        compiler_params=pltpu.CompilerParams(
            dimension_semantics=("parallel", "arbitrary"),
            vmem_limit_bytes=vmem_limit),
    )(xcol, p_fl, w, bns1, bnb)

    # ---- channel attention (one tiny matmul + softmax per batch) in plain XLA.
    pooled = sums[:, 0, :Ch] * (1.0 / float(hw))                       # (B, Ch)
    logits = jnp.matmul(pooled, jnp.transpose(ca_w[:, :, 0, 0]).astype(f32),
                        precision=jax.lax.Precision.HIGHEST) + ca_b.astype(f32)
    attn = 1.0 + jax.nn.softmax(logits, axis=-1)                       # 1 + ca
    attn = jnp.pad(attn, ((0, 0), (0, Cp - Ch))).reshape(B, 1, Cp).astype(f32)

    # ---- pass 2: (1+ca)*z1 -> ReLU -> BN (elementwise, both grid axes parallel).
    out_p = pl.pallas_call(
        _stage2_kernel,
        out_shape=jax.ShapeDtypeStruct((B, hw_pad, Cp), bf16),
        grid_spec=pltpu.PrefetchScalarGridSpec(
            num_scalar_prefetch=0,
            grid=grid,
            in_specs=[act_spec, bvec_spec, vec_spec, vec_spec],
            out_specs=act_spec),
        compiler_params=pltpu.CompilerParams(
            dimension_semantics=("parallel", "parallel"),
            vmem_limit_bytes=vmem_limit),
    )(z1, attn, bns2, bnb)

    # Drop spatial/channel padding, back to NCHW f32.
    # TODO(synk): consumers that accept NHWC bf16 can skip this extra HBM pass.
    out = out_p[:, :hw, :Ch].reshape(B, Ho, Wo, Ch)
    return jnp.transpose(out, (0, 3, 1, 2)).astype(f32)


def _reference(N, P, conv3_w, ca_w, ca_b, gamma, beta, run_mean, run_var, eps=1e-5):
    """Pure-JAX f32 reference of the PyTorch forward (eval-mode BN)."""
    hi = jax.lax.Precision.HIGHEST
    x = jax.lax.conv_general_dilated(
        N, conv3_w, window_strides=(2, 2), padding=((1, 1), (1, 1)),
        dimension_numbers=("NCHW", "OIHW", "NCHW"), precision=hi)
    s = x + P

    def bn(v):
        sc = (gamma / jnp.sqrt(run_var + eps))[None, :, None, None]
        bi = (beta - run_mean * gamma / jnp.sqrt(run_var + eps))[None, :, None, None]
        return v * sc + bi

    z1 = bn(jax.nn.relu(2.0 * s))              # SA softmax over one channel == 1
    pooled = jnp.mean(z1, axis=(2, 3))         # (B, Ch)
    logits = jnp.matmul(pooled, ca_w[:, :, 0, 0].T, precision=hi) + ca_b
    ca = jax.nn.softmax(logits, axis=-1)[:, :, None, None]
    return bn(jax.nn.relu(ca * z1 + z1))


if __name__ == "__main__":
    key = jax.random.PRNGKey(0)
    ks = jax.random.split(key, 10)
    B, Ch, H, W = 2, 8, 16, 16                 # in_planes == out_planes required
    Ho, Wo = H // 2, W // 2

    N = jax.random.normal(ks[0], (B, Ch, H, W), jnp.float32)
    P = jax.random.normal(ks[1], (B, Ch, Ho, Wo), jnp.float32)

    conv3_w = 0.1 * jax.random.normal(ks[2], (Ch, Ch, 3, 3), jnp.float32)   # no bias
    sa_w1 = 0.1 * jax.random.normal(ks[3], (1, Ch, 1, 1), jnp.float32)      # inert
    sa_b1 = jnp.zeros((1,), jnp.float32)                                    # inert
    sa_w2 = 0.1 * jax.random.normal(ks[4], (1, 1, 1, 1), jnp.float32)       # inert
    sa_b2 = jnp.zeros((1,), jnp.float32)                                    # inert
    ca_w = 0.1 * jax.random.normal(ks[5], (Ch, Ch, 1, 1), jnp.float32)
    ca_b = 0.1 * jax.random.normal(ks[6], (Ch,), jnp.float32)
    gamma = 1.0 + 0.05 * jax.random.normal(ks[7], (Ch,), jnp.float32)
    beta = 0.05 * jax.random.normal(ks[8], (Ch,), jnp.float32)
    run_mean = 0.05 * jax.random.normal(ks[9], (Ch,), jnp.float32)
    run_var = jnp.ones((Ch,), jnp.float32)

    out = botblock_sa_ca(N, P, conv3_w, sa_w1, sa_b1, sa_w2, sa_b2, ca_w, ca_b,
                         gamma, beta, run_mean, run_var)
    out = jax.block_until_ready(out)
    assert out.shape == (B, Ch, Ho, Wo)

    ref = _reference(N, P, conv3_w, ca_w, ca_b, gamma, beta, run_mean, run_var)
    assert bool(jnp.allclose(out, ref, rtol=5e-2, atol=1e-1)), \
        float(jnp.max(jnp.abs(out - ref)))
    print("KERNEL_OK")
</pallas_src>

<mosaic_0001>
module attributes {stable_mosaic.version = 11 : i64} {
  func.func @_stage1_kernel(%arg0: i32, %arg1: i32, %arg2: memref<1x64x128xbf16, #tpu.memory_space<vmem>>, %arg3: memref<1x64x128xbf16, #tpu.memory_space<vmem>>, %arg4: memref<128x128xbf16, #tpu.memory_space<any>>, %arg5: memref<1x128xf32, #tpu.memory_space<vmem>>, %arg6: memref<1x128xf32, #tpu.memory_space<vmem>>, %arg7: memref<1x64x128xbf16, #tpu.memory_space<vmem>>, %arg8: memref<1x1x128xf32, #tpu.memory_space<vmem>>, %arg9: memref<128x128xbf16, #tpu.memory_space<vmem>>, %arg10: memref<1x!tpu.dma_semaphore, #tpu.memory_space<semaphore_mem>>) attributes {dimension_semantics = [#tpu.dimension_semantics<parallel>, #tpu.dimension_semantics<arbitrary>], iteration_bounds = array<i64: 2, 1>, scalar_prefetch = 0 : i64, scratch_operands = 2 : i64, tpu.core_type = #tpu.core_type<tc>, window_params = [{transform_indices = @transform_0, window_bounds = array<i64: 1, 64, 128>}, {transform_indices = @transform_1, window_bounds = array<i64: 1, 64, 128>}, {}, {pipeline_mode = #tpu.pipeline_mode<synchronous>, transform_indices = @transform_3, window_bounds = array<i64: 1, 128>}, {pipeline_mode = #tpu.pipeline_mode<synchronous>, transform_indices = @transform_4, window_bounds = array<i64: 1, 128>}, {transform_indices = @transform_5, window_bounds = array<i64: 1, 64, 128>}, {transform_indices = @transform_6, window_bounds = array<i64: 1, 1, 128>}]} {
    %c0_i32 = arith.constant 0 : i32
    %0 = arith.cmpi eq, %arg1, %c0_i32 : i32
    %1 = arith.extui %0 : i1 to i32
    %c0_i32_0 = arith.constant 0 : i32
    %2 = arith.cmpi ne, %1, %c0_i32_0 : i32
    scf.if %2 {
      %c0_i32_21 = arith.constant 0 : i32
      %31 = tpu.memref_slice %arg10[%c0_i32_21] : memref<1x!tpu.dma_semaphore, #tpu.memory_space<semaphore_mem>> -> memref<1x!tpu.dma_semaphore, #tpu.memory_space<semaphore_mem>>
      %32 = tpu.memref_squeeze %31 : memref<1x!tpu.dma_semaphore, #tpu.memory_space<semaphore_mem>> -> memref<!tpu.dma_semaphore, #tpu.memory_space<semaphore_mem>>
      tpu.enqueue_dma source(%arg4 : memref<128x128xbf16, #tpu.memory_space<any>>) target(%arg9 : memref<128x128xbf16, #tpu.memory_space<vmem>>) target_semaphore(%32 : memref<!tpu.dma_semaphore, #tpu.memory_space<semaphore_mem>>)
      %c0_i32_22 = arith.constant 0 : i32
      %33 = tpu.memref_slice %arg10[%c0_i32_22] : memref<1x!tpu.dma_semaphore, #tpu.memory_space<semaphore_mem>> -> memref<1x!tpu.dma_semaphore, #tpu.memory_space<semaphore_mem>>
      %34 = tpu.memref_squeeze %33 : memref<1x!tpu.dma_semaphore, #tpu.memory_space<semaphore_mem>> -> memref<!tpu.dma_semaphore, #tpu.memory_space<semaphore_mem>>
      tpu.wait_dma2 semaphore(%34 : memref<!tpu.dma_semaphore, #tpu.memory_space<semaphore_mem>>) src(%arg4 : memref<128x128xbf16, #tpu.memory_space<any>>) dst(%arg9 : memref<128x128xbf16, #tpu.memory_space<vmem>>)
    } else {
    }
    %c0 = arith.constant 0 : index
    %c0_1 = arith.constant 0 : index
    %c0_2 = arith.constant 0 : index
    %3 = vector.load %arg2[%c0, %c0_1, %c0_2] : memref<1x64x128xbf16, #tpu.memory_space<vmem>>, vector<1x64x128xbf16>
    %4 = vector.shape_cast %3 : vector<1x64x128xbf16> to vector<64x128xbf16>
    %c0_3 = arith.constant 0 : index
    %c0_4 = arith.constant 0 : index
    %5 = vector.load %arg9[%c0_3, %c0_4] : memref<128x128xbf16, #tpu.memory_space<vmem>>, vector<128x128xbf16>
    %cst = arith.constant dense<0.000000e+00> : vector<64x128xf32>
    %6 = tpu.matmul %4, %5, %cst {dimension_numbers = #tpu.dot_dimension_numbers<[1], [0], [0], [1], [0, 0, 1, 1], [], []>} : vector<64x128xbf16>, vector<128x128xbf16>, vector<64x128xf32> -> vector<64x128xf32>
    %c0_5 = arith.constant 0 : index
    %c0_6 = arith.constant 0 : index
    %c0_7 = arith.constant 0 : index
    %7 = vector.load %arg3[%c0_5, %c0_6, %c0_7] : memref<1x64x128xbf16, #tpu.memory_space<vmem>>, vector<1x64x128xbf16>
    %8 = vector.shape_cast %7 : vector<1x64x128xbf16> to vector<64x128xbf16>
    %9 = arith.extf %8 : vector<64x128xbf16> to vector<64x128xf32>
    %10 = arith.addf %6, %9 : vector<64x128xf32>
    %cst_8 = arith.constant 0.000000e+00 : f32
    %11 = vector.broadcast %cst_8 : f32 to vector<64x128xf32>
    %12 = arith.maximumf %10, %11 : vector<64x128xf32>
    %c0_9 = arith.constant 0 : index
    %c0_10 = arith.constant 0 : index
    %13 = vector.load %arg5[%c0_9, %c0_10] : memref<1x128xf32, #tpu.memory_space<vmem>>, vector<1x128xf32>
    %14 = vector.broadcast %13 : vector<1x128xf32> to vector<64x128xf32>
    %15 = arith.mulf %12, %14 : vector<64x128xf32>
    %c0_11 = arith.constant 0 : index
    %c0_12 = arith.constant 0 : index
    %16 = vector.load %arg6[%c0_11, %c0_12] : memref<1x128xf32, #tpu.memory_space<vmem>>, vector<1x128xf32>
    %17 = vector.broadcast %16 : vector<1x128xf32> to vector<64x128xf32>
    %18 = arith.addf %15, %17 : vector<64x128xf32>
    %19 = arith.truncf %18 : vector<64x128xf32> to vector<64x128xbf16>
    %c0_13 = arith.constant 0 : index
    %c0_14 = arith.constant 0 : index
    %c0_15 = arith.constant 0 : index
    %20 = vector.load %arg7[%c0_13, %c0_14, %c0_15] : memref<1x64x128xbf16, #tpu.memory_space<vmem>>, vector<1x64x128xbf16>
    %21 = vector.shape_cast %20 : vector<1x64x128xbf16> to vector<64x128xbf16>
    %22 = vector.shape_cast %19 : vector<64x128xbf16> to vector<1x64x128xbf16>
    tpu.vector_store %arg7[%c0_13, %c0_14, %c0_15], %22 {strides = array<i32>} : memref<1x64x128xbf16, #tpu.memory_space<vmem>>, vector<1x64x128xbf16>,
    %cst_16 = arith.constant dense<0.000000e+00> : vector<128xf32>
    %23 = vector.multi_reduction <add>, %18, %cst_16 [0] : vector<64x128xf32> to vector<128xf32>
    %24 = vector.shape_cast %23 : vector<128xf32> to vector<1x128xf32>
    %c0_i32_17 = arith.constant 0 : i32
    %25 = arith.cmpi eq, %arg1, %c0_i32_17 : i32
    %26 = arith.extui %25 : i1 to i32
    %c0_i32_18 = arith.constant 0 : i32
    %27 = arith.cmpi ne, %26, %c0_i32_18 : i32
    scf.if %27 {
      %c0_21 = arith.constant 0 : index
      %c0_22 = arith.constant 0 : index
      %c0_23 = arith.constant 0 : index
      %31 = vector.load %arg8[%c0_21, %c0_22, %c0_23] : memref<1x1x128xf32, #tpu.memory_space<vmem>>, vector<1x1x128xf32>
      %32 = vector.shape_cast %31 : vector<1x1x128xf32> to vector<1x128xf32>
      %33 = vector.shape_cast %24 : vector<1x128xf32> to vector<1x1x128xf32>
      tpu.vector_store %arg8[%c0_21, %c0_22, %c0_23], %33 {strides = array<i32>} : memref<1x1x128xf32, #tpu.memory_space<vmem>>, vector<1x1x128xf32>,
    } else {
    }
    %c0_i32_19 = arith.constant 0 : i32
    %28 = arith.cmpi ne, %arg1, %c0_i32_19 : i32
    %29 = arith.extui %28 : i1 to i32
    %c0_i32_20 = arith.constant 0 : i32
    %30 = arith.cmpi ne, %29, %c0_i32_20 : i32
    scf.if %30 {
      %c0_21 = arith.constant 0 : index
      %c0_22 = arith.constant 0 : index
      %c0_23 = arith.constant 0 : index
      %31 = vector.load %arg8[%c0_21, %c0_22, %c0_23] : memref<1x1x128xf32, #tpu.memory_space<vmem>>, vector<1x1x128xf32>
      %32 = vector.shape_cast %31 : vector<1x1x128xf32> to vector<1x128xf32>
      %33 = arith.addf %32, %24 : vector<1x128xf32>
      %c0_24 = arith.constant 0 : index
      %c0_25 = arith.constant 0 : index
      %c0_26 = arith.constant 0 : index
      %34 = vector.load %arg8[%c0_24, %c0_25, %c0_26] : memref<1x1x128xf32, #tpu.memory_space<vmem>>, vector<1x1x128xf32>
      %35 = vector.shape_cast %34 : vector<1x1x128xf32> to vector<1x128xf32>
      %36 = vector.shape_cast %33 : vector<1x128xf32> to vector<1x1x128xf32>
      tpu.vector_store %arg8[%c0_24, %c0_25, %c0_26], %36 {strides = array<i32>} : memref<1x1x128xf32, #tpu.memory_space<vmem>>, vector<1x1x128xf32>,
    } else {
    }
    return
  }
  func.func @transform_0(%arg0: i32, %arg1: i32) -> (i32, i32, i32) {
    %c0_i32 = arith.constant 0 : i32
    %c0_i32_0 = arith.constant 0 : i32
    return %arg0, %arg1, %c0_i32 : i32, i32, i32
  }
  func.func @transform_1(%arg0: i32, %arg1: i32) -> (i32, i32, i32) {
    %c0_i32 = arith.constant 0 : i32
    %c0_i32_0 = arith.constant 0 : i32
    return %arg0, %arg1, %c0_i32 : i32, i32, i32
  }
  func.func @transform_3(%arg0: i32, %arg1: i32) -> (i32, i32) {
    %c0_i32 = arith.constant 0 : i32
    %c0_i32_0 = arith.constant 0 : i32
    %c0_i32_1 = arith.constant 0 : i32
    return %c0_i32, %c0_i32_0 : i32, i32
  }
  func.func @transform_4(%arg0: i32, %arg1: i32) -> (i32, i32) {
    %c0_i32 = arith.constant 0 : i32
    %c0_i32_0 = arith.constant 0 : i32
    %c0_i32_1 = arith.constant 0 : i32
    return %c0_i32, %c0_i32_0 : i32, i32
  }
  func.func @transform_5(%arg0: i32, %arg1: i32) -> (i32, i32, i32) {
    %c0_i32 = arith.constant 0 : i32
    %c0_i32_0 = arith.constant 0 : i32
    return %arg0, %arg1, %c0_i32 : i32, i32, i32
  }
  func.func @transform_6(%arg0: i32, %arg1: i32) -> (i32, i32, i32) {
    %c0_i32 = arith.constant 0 : i32
    %c0_i32_0 = arith.constant 0 : i32
    %c0_i32_1 = arith.constant 0 : i32
    return %arg0, %c0_i32, %c0_i32_0 : i32, i32, i32
  }
}

</mosaic_0001>

<llo_original>
// kernel: tpu_custom_call.1
$region0: #{tpu_custom_call.1}
  #allocation0 [shape = 'u32[]', space=smem, size = 0x4, offset = 0x4, fixed_abs, tag = 'smem constant byte address 0x4 - core index']
  #allocation1 [shape = 'u32[144,128]{1,0:T(1,128)}', space=vmem, size = 0x12000, scoped, tag = 'internal scratch']
  #allocation2 [shape = 'bf16[128,128]{1,0:T(8,128)(2,1)}', space=vmem, size = 0x8000, scoped, tag = 'scratch operand']
  #allocation3 [shape = 's32[1]{0}', space=sflag, size = 0x4, scoped, tag = 'scratch operand']
  #allocation12 [shape = 's32[]', space=sflag, size = 0x4, offset = 0, fixed_abs, tag = 'sflag constant byte address 0x0 - dummy sync flag']
  #allocation13 [shape = 's32[]', space=sflag, size = 0x4, offset = 0, fixed_abs, tag = 'sflag constant byte address 0x0 - dummy sync flag']
  #allocation14 [shape = 'u32[]', space=smem, size = 0x4, offset = 0x44, fixed_abs, tag = 'smem constant byte address 0x44 - assertion arg 0']
  #allocation15 [shape = 'u32[]', space=smem, size = 0x4, offset = 0x48, fixed_abs, tag = 'smem constant byte address 0x48 - assertion arg 1']
  %s0 = inlined_call_operand.hbm [shape: bf16[2,64,128], index: 0, kind: input, shape index: {}]
  %s1 = inlined_call_operand.hbm [shape: bf16[2,64,128], index: 1, kind: input, shape index: {}]
  %s2 = inlined_call_operand.hbm [shape: bf16[128,128], index: 2, kind: input, shape index: {}]
  %s3 = inlined_call_operand.vmem [shape: f32[1,128], index: 3, kind: input, shape index: {}]
  %s4 = inlined_call_operand.vmem [shape: f32[1,128], index: 4, kind: input, shape index: {}]
  %s5 = inlined_call_operand.hbm [shape: bf16[2,64,128], index: 5, kind: output, shape index: {0}]
  %s6 = inlined_call_operand.hbm [shape: f32[2,1,128], index: 6, kind: output, shape index: {1}]
  %7 = xla_tuple %s5, %s6
  %s8 = sld [smem:[#allocation0]]
  $region81: #{tpu_custom_call.1} parent=0
    _
  %s10 = ssub.s32 1, %s8
  %s11 = scalar_select 0, %s10, %s8
  $region1: #{tpu_custom_call.1} parent=0
    #allocation4 [shape = 'u8[32768]{0}', space=vmem, size = 0x8000, scoped, tag = 'input window, operand 0']
    #allocation5 [shape = 's32[2]{0}', space=sflag, size = 0x8, scoped, tag = 'scoped memory for tpu_custom_call.1']
    #allocation6 [shape = 's32[2]{0}', space=sflag, size = 0x8, scoped, tag = 'scoped memory for tpu_custom_call.1']
    #allocation7 [shape = 'u8[32768]{0}', space=vmem, size = 0x8000, scoped, tag = 'input window, operand 1']
    #allocation8 [shape = 's32[2]{0}', space=sflag, size = 0x8, scoped, tag = 'scoped memory for tpu_custom_call.1']
    #allocation9 [shape = 'u8[32768]{0}', space=vmem, size = 0x8000, scoped, tag = 'output window, operand 0']
    #allocation10 [shape = 'u8[1024]{0}', space=vmem, size = 0x400, scoped, tag = 'output window, operand 1']
    #allocation11 [shape = 's32[2]{0}', space=sflag, size = 0x8, scoped, tag = 'scoped memory for tpu_custom_call.1']
    %12 = vsyncpa [#allocation5], 0
    %s13 = scalar_lea.sflag [#allocation5], 1
    %14 = vsyncpa %s13, 0
    %15 = vsyncpa [#allocation8], 0
    %s16 = scalar_lea.sflag [#allocation8], 1
    %17 = vsyncpa %s16, 0
    %18 = vsyncpa [#allocation6], 0
    %s19 = scalar_lea.sflag [#allocation6], 1
    %20 = vsyncpa %s19, 0
    %21 = vsyncpa [#allocation11], 0
    %s22 = scalar_lea.sflag [#allocation11], 1
    %23 = vsyncpa %s22, 0
    loop: start=0, step=1, limit=4
    $region2: #{tpu_custom_call.1} parent=1 // loop_pre_header
      _
    $region3: #{tpu_custom_call.1} parent=1 // loop_header
      %s25 = sphi 0, %s29
      %p26 = scmp.ge.s32.totalorder %s25, 4
      %s32 = sphi 0, %s44
      %s33 = sphi 0, %s40
      %s34 = sphi 0, %s32
      %s35 = sphi 0, %s33
      %s36 = sphi 0, %s34
      %s37 = sphi 0, %s35
      %s49 = sphi 0, %s51
      %s52 = sphi 0, %s49
      %s53 = sphi 0, %s52
      %s69 = sphi 0, %s53
      %s77 = sphi 0, %s79
      %s80 = sphi 0, %s77
      %s81 = sphi 0, %s80
      %s97 = sphi 0, %s81
      %s101 = sphi 0, %s101
      %s103 = sphi 0, %s101
      %s104 = sphi 0, %s103
      %s118 = sphi 0, %s104
      %s122 = sphi 0, %s122
      %s124 = sphi 0, %s122
      %s125 = sphi 0, %s124
      %s139 = sphi 0, %s125
      %s147 = sphi 0, %s149
      %s150 = sphi 0, %s147
      %s151 = sphi 0, %s150
      %s167 = sphi 0, %s151
      %s173 = sphi 0, %s175
      %s176 = sphi 0, %s173
      %s177 = sphi 0, %s176
      %s193 = sphi 0, %s177
    $region4: #{tpu_custom_call.1} parent=1 // loop_header_branch
      %28 = sbr.rel (%p26) target = $region8
    $region5: #{tpu_custom_call.1} parent=1 // loop_body
      %s30 = ssub.s32 %s25, 1
      %s31 = ssub.s32 %s25, 2
      %s38 = sadd.s32 1, %s33
      %p39 = scmp.ge.s32.totalorder %s38, 1
      %s40 = scalar_select %p39, 0, %s38
      %s41 = sadd.s32 1, %s32
      %s42 = scalar_select %p39, %s41, %s32
      %p43 = scmp.ge.s32.totalorder %s42, 2
      %s44 = scalar_select %p43, 0, %s42
      %s45 = ssub.s32 %s32, %s44
      %s46 = ssub.s32 %s33, %s40
      %s47 = sor.u32 %s45, %s46
      %p48 = scmp.eq.s32.totalorder %s47, 0
      %s50 = sadd.s32 %s49, 1
      %s51 = scalar_select %p48, %s49, %s50
      %p54 = pneg %p48
      %p55 = scmp.eq.s32.totalorder %s25, 1
      %p56 = por %p54, %p55
      %p57 = scmp.ne.s32.totalorder %s49, %s52
      %p58 = scmp.eq.s32.totalorder %s25, 0
      %p59 = por %p57, %p58
      %p60 = scmp.ne.s32.totalorder %s49, %s52
      %p61 = scmp.eq.s32.totalorder %s30, 1
      %p62 = por %p60, %p61
      %p63 = scmp.ne.s32.totalorder %s52, %s53
      %p64 = scmp.eq.s32.totalorder %s30, 0
      %p65 = por %p63, %p64
      %p66 = scmp.ne.s32.totalorder %s52, %s53
      %p67 = scmp.eq.s32.totalorder %s31, 1
      %p68 = por %p66, %p67
      %p70 = scmp.ne.s32.totalorder %s53, %s69
      %p71 = scmp.eq.s32.totalorder %s31, 0
      %p72 = por %p70, %p71
      %s73 = ssub.s32 %s32, %s44
      %s74 = ssub.s32 %s33, %s40
      %s75 = sor.u32 %s73, %s74
      %p76 = scmp.eq.s32.totalorder %s75, 0
      %s78 = sadd.s32 %s77, 1
      %s79 = scalar_select %p76, %s77, %s78
      %p82 = pneg %p76
      %p83 = scmp.eq.s32.totalorder %s25, 1
      %p84 = por %p82, %p83
      %p85 = scmp.ne.s32.totalorder %s77, %s80
      %p86 = scmp.eq.s32.totalorder %s25, 0
      %p87 = por %p85, %p86
      %p88 = scmp.ne.s32.totalorder %s77, %s80
      %p89 = scmp.eq.s32.totalorder %s30, 1
      %p90 = por %p88, %p89
      %p91 = scmp.ne.s32.totalorder %s80, %s81
      %p92 = scmp.eq.s32.totalorder %s30, 0
      %p93 = por %p91, %p92
      %p94 = scmp.ne.s32.totalorder %s80, %s81
      %p95 = scmp.eq.s32.totalorder %s31, 1
      %p96 = por %p94, %p95
      %p98 = scmp.ne.s32.totalorder %s81, %s97
      %p99 = scmp.eq.s32.totalorder %s31, 0
      %p100 = por %p98, %p99
      %s102 = sadd.s32 %s101, 1
      %p105 = scmp.eq.s32.totalorder %s25, 1
      %p106 = scmp.ne.s32.totalorder %s101, %s103
      %p107 = scmp.eq.s32.totalorder %s25, 0
      %p108 = por %p106, %p107
      %p109 = scmp.ne.s32.totalorder %s101, %s103
      %p110 = scmp.eq.s32.totalorder %s30, 1
      %p111 = por %p109, %p110
      %p112 = scmp.ne.s32.totalorder %s103, %s104
      %p113 = scmp.eq.s32.totalorder %s30, 0
      %p114 = por %p112, %p113
      %p115 = scmp.ne.s32.totalorder %s103, %s104
      %p116 = scmp.eq.s32.totalorder %s31, 1
      %p117 = por %p115, %p116
      %p119 = scmp.ne.s32.totalorder %s104, %s118
      %p120 = scmp.eq.s32.totalorder %s31, 0
      %p121 = por %p119, %p120
      %s123 = sadd.s32 %s122, 1
      %p126 = scmp.eq.s32.totalorder %s25, 1
      %p127 = scmp.ne.s32.totalorder %s122, %s124
      %p128 = scmp.eq.s32.totalorder %s25, 0
      %p129 = por %p127, %p128
      %p130 = scmp.ne.s32.totalorder %s122, %s124
      %p131 = scmp.eq.s32.totalorder %s30, 1
      %p132 = por %p130, %p131
      %p133 = scmp.ne.s32.totalorder %s124, %s125
      %p134 = scmp.eq.s32.totalorder %s30, 0
      %p135 = por %p133, %p134
      %p136 = scmp.ne.s32.totalorder %s124, %s125
      %p137 = scmp.eq.s32.totalorder %s31, 1
      %p138 = por %p136, %p137
      %p140 = scmp.ne.s32.totalorder %s125, %s139
      %p141 = scmp.eq.s32.totalorder %s31, 0
      %p142 = por %p140, %p141
      %s143 = ssub.s32 %s32, %s44
      %s144 = ssub.s32 %s33, %s40
      %s145 = sor.u32 %s143, %s144
      %p146 = scmp.eq.s32.totalorder %s145, 0
      %s148 = sadd.s32 %s147, 1
      %s149 = scalar_select %p146, %s147, %s148
      %p152 = pneg %p146
      %p153 = scmp.eq.s32.totalorder %s25, 1
      %p154 = por %p152, %p153
      %p155 = scmp.ne.s32.totalorder %s147, %s150
      %p156 = scmp.eq.s32.totalorder %s25, 0
      %p157 = por %p155, %p156
      %p158 = scmp.ne.s32.totalorder %s147, %s150
      %p159 = scmp.eq.s32.totalorder %s30, 1
      %p160 = por %p158, %p159
      %p161 = scmp.ne.s32.totalorder %s150, %s151
      %p162 = scmp.eq.s32.totalorder %s30, 0
      %p163 = por %p161, %p162
      %p164 = scmp.ne.s32.totalorder %s150, %s151
      %p165 = scmp.eq.s32.totalorder %s31, 1
      %p166 = por %p164, %p165
      %p168 = scmp.ne.s32.totalorder %s151, %s167
      %p169 = scmp.eq.s32.totalorder %s31, 0
      %p170 = por %p168, %p169
      %s171 = ssub.s32 %s32, %s44
      %p172 = scmp.eq.s32.totalorder %s171, 0
      %s174 = sadd.s32 %s173, 1
      %s175 = scalar_select %p172, %s173, %s174
      %p178 = pneg %p172
      %p179 = scmp.eq.s32.totalorder %s25, 1
      %p180 = por %p178, %p179
      %p181 = scmp.ne.s32.totalorder %s173, %s176
      %p182 = scmp.eq.s32.totalorder %s25, 0
      %p183 = por %p181, %p182
      %p184 = scmp.ne.s32.totalorder %s173, %s176
      %p185 = scmp.eq.s32.totalorder %s30, 1
      %p186 = por %p184, %p185
      %p187 = scmp.ne.s32.totalorder %s176, %s177
      %p188 = scmp.eq.s32.totalorder %s30, 0
      %p189 = por %p187, %p188
      %p190 = scmp.ne.s32.totalorder %s176, %s177
      %p191 = scmp.eq.s32.totalorder %s31, 1
      %p192 = por %p190, %p191
      %p194 = scmp.ne.s32.totalorder %s177, %s193
      %p195 = scmp.eq.s32.totalorder %s31, 0
      %p196 = por %p194, %p195
      %p197 = scmp.le.s32.totalorder 1, %s25
      %p198 = scmp.lt.s32.totalorder %s25, 3
      %p199 = pnand %p197, %p198
      %p200 = pneg %p199
      // Predicated region
      $region9: #{tpu_custom_call.1} parent=5 // pred_check
        _
      $region10: #{tpu_custom_call.1} parent=5 // pred_check_branch
        %202 = sbr.rel (%p199) target = $region12
      $region11: #{tpu_custom_call.1} parent=5 // pred_region
        %s203 = ssub.s32 %s25, 1
        // Predicated region
        $region13: #{tpu_custom_call.1} parent=11 // pred_check
          %p204 = pneg %p114
        $region14: #{tpu_custom_call.1} parent=11 // pred_check_branch
          %206 = sbr.rel (%p204) target = $region16
        $region15: #{tpu_custom_call.1} parent=11 // pred_region
          _
        $region16: #{tpu_custom_call.1} parent=11 // pred_fallthru
          _
        // Predicated region
        $region17: #{tpu_custom_call.1} parent=11 // pred_check
          %p207 = pneg %p135
        $region18: #{tpu_custom_call.1} parent=11 // pred_check_branch
          %209 = sbr.rel (%p207) target = $region20
        $region19: #{tpu_custom_call.1} parent=11 // pred_region
          _
        $region20: #{tpu_custom_call.1} parent=11 // pred_fallthru
          _
      $region12: #{tpu_custom_call.1} parent=5 // pred_fallthru
        _
      %p210 = scmp.lt.s32.totalorder %s25, 2
      // Predicated region
      $region21: #{tpu_custom_call.1} parent=5 // pred_check
        %p211 = pneg %p210
      $region22: #{tpu_custom_call.1} parent=5 // pred_check_branch
        %213 = sbr.rel (%p211) target = $region24
      $region23: #{tpu_custom_call.1} parent=5 // pred_region
        // Predicated region
        $region25: #{tpu_custom_call.1} parent=23 // pred_check
          %p214 = pneg %p59
        $region26: #{tpu_custom_call.1} parent=23 // pred_check_branch
          %216 = sbr.rel (%p214) target = $region28
        $region27: #{tpu_custom_call.1} parent=23 // pred_region
          %s217 = sand.u32 %s49, 1
          %s218 = scalar_lea.sflag [#allocation5], %s217
          %s219 = sand.u32 %s49, 1
          %s220 = smul.addr %s219, 32
          %s221 = scalar_lea.vmem [#allocation4], %s220
          %s222 = smul.u32 8, %s33
          %s224 = ssub.s32 512, 512
          %225 = vsyncadd %s218, %s224
          %s226 = smul.addr %s32, 8
          %s227 = sadd.s32 %s222, %s226
          %s228 = smul.addr %s227, 64
          %s229 = scalar_lea.hbm %s0, %s228
          %s230 = sshll.u32 %s221, 4
          %s231 = int_to_ptr.vmem [resolvable:$true] %s230
          %236 = dma.hbm_to_vmem [thread:$0]  %s229, 512, %s231, %s218, 64, 64, 4
        $region28: #{tpu_custom_call.1} parent=23 // pred_fallthru
          _
        // Predicated region
        $region29: #{tpu_custom_call.1} parent=23 // pred_check
          %p237 = pneg %p87
        $region30: #{tpu_custom_call.1} parent=23 // pred_check_branch
          %239 = sbr.rel (%p237) target = $region32
        $region31: #{tpu_custom_call.1} parent=23 // pred_region
          %s240 = sand.u32 %s77, 1
          %s241 = scalar_lea.sflag [#allocation8], %s240
          %s242 = sand.u32 %s77, 1
          %s243 = smul.addr %s242, 32
          %s244 = scalar_lea.vmem [#allocation7], %s243
          %s245 = smul.u32 8, %s33
          %s247 = ssub.s32 512, 512
          %248 = vsyncadd %s241, %s247
          %s249 = smul.addr %s32, 8
          %s250 = sadd.s32 %s245, %s249
          %s251 = smul.addr %s250, 64
          %s252 = scalar_lea.hbm %s1, %s251
          %s253 = sshll.u32 %s244, 4
          %s254 = int_to_ptr.vmem [resolvable:$true] %s253
          %259 = dma.hbm_to_vmem [thread:$0]  %s252, 512, %s254, %s241, 64, 64, 4
        $region32: #{tpu_custom_call.1} parent=23 // pred_fallthru
          _
      $region24: #{tpu_custom_call.1} parent=5 // pred_fallthru
        _
      %p260 = scmp.le.s32.totalorder 1, %s25
      %p261 = scmp.lt.s32.totalorder %s25, 3
      %p262 = pnand %p260, %p261
      %p263 = pneg %p262
      // Predicated region
      $region33: #{tpu_custom_call.1} parent=5 // pred_check
        _
      $region34: #{tpu_custom_call.1} parent=5 // pred_check_branch
        %265 = sbr.rel (%p262) target = $region36
      $region35: #{tpu_custom_call.1} parent=5 // pred_region
        %s266 = ssub.s32 %s25, 1
        %s267 = sand.u32 %s52, 1
        %s268 = scalar_lea.sflag [#allocation5], %s267
        %s269 = sand.u32 %s52, 1
        %s270 = smul.addr %s269, 32
        %s271 = scalar_lea.vmem [#allocation4], %s270
        // Predicated region
        $region37: #{tpu_custom_call.1} parent=35 // pred_check
          %p272 = pneg %p65
        $region38: #{tpu_custom_call.1} parent=35 // pred_check_branch
          %274 = sbr.rel (%p272) target = $region40
        $region39: #{tpu_custom_call.1} parent=35 // pred_region
          %275 = dma.done %s268, 512
        $region40: #{tpu_custom_call.1} parent=35 // pred_fallthru
          _
        %s276 = sand.u32 %s80, 1
        %s277 = scalar_lea.sflag [#allocation8], %s276
        %s278 = sand.u32 %s80, 1
        %s279 = smul.addr %s278, 32
        %s280 = scalar_lea.vmem [#allocation7], %s279
        // Predicated region
        $region41: #{tpu_custom_call.1} parent=35 // pred_check
          %p281 = pneg %p93
        $region42: #{tpu_custom_call.1} parent=35 // pred_check_branch
          %283 = sbr.rel (%p281) target = $region44
        $region43: #{tpu_custom_call.1} parent=35 // pred_region
          %284 = dma.done %s277, 512
        $region44: #{tpu_custom_call.1} parent=35 // pred_fallthru
          _
        %s285 = sand.u32 %s52, 1
        %s286 = scalar_lea.sflag [#allocation5], %s285
        %s287 = sand.u32 %s52, 1
        %s288 = smul.addr %s287, 32
        %s289 = scalar_lea.vmem [#allocation4], %s288
        %p290 = pneg %p65
        %p291 = pneg %p62
        %s292 = sand.u32 %s80, 1
        %s293 = scalar_lea.sflag [#allocation8], %s292
        %s294 = sand.u32 %s80, 1
        %s295 = smul.addr %s294, 32
        %s296 = scalar_lea.vmem [#allocation7], %s295
        %p297 = pneg %p93
        %p298 = pneg %p90
        %p299 = pneg %p114
        %p300 = pneg %p111
        %p301 = pneg %p135
        %p302 = pneg %p132
        %p303 = pneg %p163
        %p304 = pneg %p160
        %s305 = sand.u32 %s150, 1
        %s306 = scalar_lea.sflag [#allocation6], %s305
        %s307 = sand.u32 %s150, 1
        %s308 = smul.addr %s307, 32
        %s309 = scalar_lea.vmem [#allocation9], %s308
        %p310 = pneg %p189
        %p311 = pneg %p186
        %s312 = sand.u32 %s176, 1
        %s313 = scalar_lea.sflag [#allocation11], %s312
        %s314 = sand.u32 %s176, 1
        %s315 = scalar_lea.vmem [#allocation10], %s314
        %s316 = smul.u32 8, %s35
        %s317 = smul.u32 8, %s35
        %s318 = smul.u32 8, %s35
        %p320 = scmp.eq.s32.totalorder %s35, 0
        // Predicated region
        $region45: #{tpu_custom_call.1} parent=35 // pred_check
          %p321 = pneg %p320
        $region46: #{tpu_custom_call.1} parent=35 // pred_check_branch
          %323 = sbr.rel (%p321) target = $region48
        $region47: #{tpu_custom_call.1} parent=35 // pred_region
          // Predicated region
          $region49: #{tpu_custom_call.1} parent=47 // pred_check
            _
          $region50: #{tpu_custom_call.1} parent=47 // pred_check_branch
            %325 = sbr.rel target = $region52
          $region51: #{tpu_custom_call.1} parent=47 // pred_region
            %326 = sst [smem:[#allocation14]] [#allocation13]
            %327 = sst [smem:[#allocation15]] [#allocation12]
          $region52: #{tpu_custom_call.1} parent=47 // pred_fallthru
            _
          %329 = shalt.err (0)
          %s331 = sshll.u32 [#allocation2], 4
          %s332 = int_to_ptr.vmem [resolvable:$true] %s331
          %334 = dma.hbm_to_vmem [thread:$0]  %s2, 1024, %s332, [#allocation3]
          %s335 = smul.u32 4, 16
          %s336 = smul.u32 %s335, 1
          %s337 = sshll.u32 %s336, 4
          %338 = dma.done [#allocation3], %s337
        $region48: #{tpu_custom_call.1} parent=35 // pred_fallthru
          _
        %v339 = vld [vmem:[%s271] sm:$0xf]
        %v340 = vld [vmem:[%s271 + $0x4] sm:$0xf]
        %v341 = vld [vmem:[%s271 + $0x8] sm:$0xf]
        %v342 = vld [vmem:[%s271 + $0xc] sm:$0xf]
        %v343 = vld [vmem:[%s271 + $0x10] sm:$0xf]
        %v344 = vld [vmem:[%s271 + $0x14] sm:$0xf]
        %v345 = vld [vmem:[%s271 + $0x18] sm:$0xf]
        %v346 = vld [vmem:[%s271 + $0x1c] sm:$0xf]
        %v347 = vld [vmem:[#allocation2] sm:$0xf]
        %v348 = vld [vmem:[#allocation2 + $0x4] sm:$0xf]
        %v349 = vld [vmem:[#allocation2 + $0x8] sm:$0xf]
        %v350 = vld [vmem:[#allocation2 + $0xc] sm:$0xf]
        %v351 = vld [vmem:[#allocation2 + $0x10] sm:$0xf]
        %v352 = vld [vmem:[#allocation2 + $0x14] sm:$0xf]
        %v353 = vld [vmem:[#allocation2 + $0x18] sm:$0xf]
        %v354 = vld [vmem:[#allocation2 + $0x1c] sm:$0xf]
        %v355 = vld [vmem:[#allocation2 + $0x20] sm:$0xf]
        %v356 = vld [vmem:[#allocation2 + $0x24] sm:$0xf]
        %v357 = vld [vmem:[#allocation2 + $0x28] sm:$0xf]
        %v358 = vld [vmem:[#allocation2 + $0x2c] sm:$0xf]
        %v359 = vld [vmem:[#allocation2 + $0x30] sm:$0xf]
        %v360 = vld [vmem:[#allocation2 + $0x34] sm:$0xf]
        %v361 = vld [vmem:[#allocation2 + $0x38] sm:$0xf]
        %v362 = vld [vmem:[#allocation2 + $0x3c] sm:$0xf]
        %v363 = vld [vmem:[%s280] sm:$0xf]
        %v364 = vld [vmem:[%s280 + $0x4] sm:$0xf]
        %v365 = vld [vmem:[%s280 + $0x8] sm:$0xf]
        %v366 = vld [vmem:[%s280 + $0xc] sm:$0xf]
        %v367 = vld [vmem:[%s280 + $0x10] sm:$0xf]
        %v368 = vld [vmem:[%s280 + $0x14] sm:$0xf]
        %v369 = vld [vmem:[%s280 + $0x18] sm:$0xf]
        %v370 = vld [vmem:[%s280 + $0x1c] sm:$0xf]
        %v371 = vunpack.c.l.bf16 %v363
        %v372 = vunpack.c.l.bf16 %v364
        %v373 = vunpack.c.l.bf16 %v365
        %v374 = vunpack.c.l.bf16 %v366
        %v375 = vunpack.c.l.bf16 %v367
        %v376 = vunpack.c.l.bf16 %v368
        %v377 = vunpack.c.l.bf16 %v369
        %v378 = vunpack.c.l.bf16 %v370
        %v387 = vunpack.c.l.b16 %v339
        %v388 = vunpack.c.l.b16 %v340
        %v389 = vunpack.c.l.b16 %v341
        %v390 = vunpack.c.l.b16 %v342
        %v391 = vunpack.c.l.b16 %v343
        %v392 = vunpack.c.l.b16 %v344
        %v393 = vunpack.c.l.b16 %v345
        %v394 = vunpack.c.l.b16 %v346
        %v395 = vpack.c.b16 %v388, %v387
        %v396 = vpack.c.b16 %v390, %v389
        %v397 = vpack.c.b16 %v392, %v391
        %v398 = vpack.c.b16 %v394, %v393
        %v419 = vunpack.c.l.b16 %v347
        %v420 = vunpack.c.l.b16 %v348
        %v421 = vunpack.c.l.b16 %v349
        %v422 = vunpack.c.l.b16 %v350
        %v423 = vunpack.c.l.b16 %v351
        %v424 = vunpack.c.l.b16 %v352
        %v425 = vunpack.c.l.b16 %v353
        %v426 = vunpack.c.l.b16 %v354
        %v427 = vunpack.c.l.b16 %v355
        %v428 = vunpack.c.l.b16 %v356
        %v429 = vunpack.c.l.b16 %v357
        %v430 = vunpack.c.l.b16 %v358
        %v431 = vunpack.c.l.b16 %v359
        %v432 = vunpack.c.l.b16 %v360
        %v433 = vunpack.c.l.b16 %v361
        %v434 = vunpack.c.l.b16 %v362
        %v435 = vpack.c.b16 %v420, %v419
        %v436 = vpack.c.b16 %v422, %v421
        %v437 = vpack.c.b16 %v424, %v423
        %v438 = vpack.c.b16 %v426, %v425
        %v439 = vpack.c.b16 %v428, %v427
        %v440 = vpack.c.b16 %v430, %v429
        %v441 = vpack.c.b16 %v432, %v431
        %v442 = vpack.c.b16 %v434, %v433
        %451 = vmatprep.subr.bf16.mxu0 0
        %452 = vmatpush1.bf16.msra.mxu0 %v442
        %453 = vmatprep.subr.bf16.mxu0 0
        %454 = vmatpush1.bf16.msra.mxu0 %v441
        %455 = vmatprep.subr.bf16.mxu0 0
        %456 = vmatpush1.bf16.msra.mxu0 %v440
        %457 = vmatprep.subr.bf16.mxu0 0
        %458 = vmatpush1.bf16.msra.mxu0 %v439
        %459 = vmatprep.subr.bf16.mxu0 0
        %460 = vmatpush1.bf16.msra.mxu0 %v438
        %461 = vmatprep.subr.bf16.mxu0 0
        %462 = vmatpush1.bf16.msra.mxu0 %v437
        %463 = vmatprep.subr.bf16.mxu0 0
        %464 = vmatpush1.bf16.msra.mxu0 %v436
        %465 = vmatprep.subr.bf16.mxu0 0
        %466 = vmatpush1.bf16.msra.mxu0 %v435
        %467 = vmatprep.subr.bf16.mxu0 0
        %468 = vmatpush2.bf16.msra.mxu0 0
        %469 = vmatprep.subr.bf16.mxu0 0
        %470 = vmatpush2.bf16.msra.mxu0 0
        %471 = vmatprep.subr.bf16.mxu0 0
        %472 = vmatpush2.bf16.msra.mxu0 0
        %473 = vmatprep.subr.bf16.mxu0 0
        %474 = vmatpush2.bf16.msra.mxu0 0
        %475 = vmatprep.subr.bf16.mxu0 0
        %476 = vmatpush2.bf16.msra.mxu0 0
        %477 = vmatprep.subr.bf16.mxu0 0
        %478 = vmatpush2.bf16.msra.mxu0 0
        %479 = vmatprep.subr.bf16.mxu0 0
        %480 = vmatpush2.bf16.msra.mxu0 0
        %481 = vmatprep.subr.bf16.mxu0 0
        %482 = vmatpush2.bf16.msra.mxu0 0
        %483 = vmatprep.mubr.bf16.mxu0 0
        %484 = vmatmul.mubr.bf16.gmra.mxu0 %v395
        %v485 = vpop.f32.mrf.mxu0
        %v486 = vadd.f32 %v371, %v485
        %v487 = vpop.f32.mrf.mxu0
        %v488 = vpop.f32.mrf.mxu0
        %v489 = vadd.f32 %v372, %v488
        %v490 = vpop.f32.mrf.mxu0
        %491 = vmatprep.mubr.bf16.mxu0 0
        %492 = vmatmul.mubr.bf16.gmra.mxu0 %v396
        %v493 = vpop.f32.mrf.mxu0
        %v494 = vadd.f32 %v373, %v493
        %v495 = vpop.f32.mrf.mxu0
        %v496 = vpop.f32.mrf.mxu0
        %v497 = vadd.f32 %v374, %v496
        %v498 = vpop.f32.mrf.mxu0
        %499 = vmatprep.mubr.bf16.mxu0 0
        %500 = vmatmul.mubr.bf16.gmra.mxu0 %v397
        %v501 = vpop.f32.mrf.mxu0
        %v502 = vadd.f32 %v375, %v501
        %v503 = vpop.f32.mrf.mxu0
        %v504 = vpop.f32.mrf.mxu0
        %v505 = vadd.f32 %v376, %v504
        %v506 = vpop.f32.mrf.mxu0
        %507 = vmatprep.mubr.bf16.mxu0 0
        %508 = vmatmul.mubr.bf16.gmra.mxu0 %v398
        %v509 = vpop.f32.mrf.mxu0
        %v510 = vadd.f32 %v377, %v509
        %v511 = vpop.f32.mrf.mxu0
        %v512 = vpop.f32.mrf.mxu0
        %v513 = vadd.f32 %v378, %v512
        %v514 = vpop.f32.mrf.mxu0
        %515 = vdwg.mxu0
        %v516 = vmax.f32 %v486, 0.0
        %v517 = vmax.f32 %v489, 0.0
        %v518 = vmax.f32 %v494, 0.0
        %v519 = vmax.f32 %v497, 0.0
        %v520 = vmax.f32 %v502, 0.0
        %v521 = vmax.f32 %v505, 0.0
        %v522 = vmax.f32 %v510, 0.0
        %v523 = vmax.f32 %v513, 0.0
        %v524 = vld [vmem:[%s3] sm:$0x1]
        %v526 = vlaneseq
        %v527 = vshrl.u32 %v526, 7
        %v528 = vsub.s32 0, %v527
        %v529 = vrot.slane %v524, %v528
        %v531 = vmul.f32 %v516, %v529
        %v532 = vmul.f32 %v517, %v529
        %v533 = vmul.f32 %v518, %v529
        %v534 = vmul.f32 %v519, %v529
        %v535 = vmul.f32 %v520, %v529
        %v536 = vmul.f32 %v521, %v529
        %v537 = vmul.f32 %v522, %v529
        %v538 = vmul.f32 %v523, %v529
        %v539 = vld [vmem:[%s4] sm:$0x1]
        %v541 = vlaneseq
        %v542 = vshrl.u32 %v541, 7
        %v543 = vsub.s32 0, %v542
        %v544 = vrot.slane %v539, %v543
        %v546 = vadd.f32 %v531, %v544
        %v547 = vadd.f32 %v532, %v544
        %v548 = vadd.f32 %v533, %v544
        %v549 = vadd.f32 %v534, %v544
        %v550 = vadd.f32 %v535, %v544
        %v551 = vadd.f32 %v536, %v544
        %v552 = vadd.f32 %v537, %v544
        %v553 = vadd.f32 %v538, %v544
        %v554 = vpack.c.bf16 %v547, %v546
        %v555 = vpack.c.bf16 %v549, %v548
        %v556 = vpack.c.bf16 %v551, %v550
        %v557 = vpack.c.bf16 %v553, %v552
        %v562 = vunpack.c.l.b16 %v554
        %v563 = vunpack.c.h.b16 %v554
        %v564 = vunpack.c.l.b16 %v555
        %v565 = vunpack.c.h.b16 %v555
        %v566 = vunpack.c.l.b16 %v556
        %v567 = vunpack.c.h.b16 %v556
        %v568 = vunpack.c.l.b16 %v557
        %v569 = vunpack.c.h.b16 %v557
        %v570 = vpack.c.b16 %v562, %v562
        %v571 = vpack.c.b16 %v563, %v563
        %v572 = vpack.c.b16 %v564, %v564
        %v573 = vpack.c.b16 %v565, %v565
        %v574 = vpack.c.b16 %v566, %v566
        %v575 = vpack.c.b16 %v567, %v567
        %v576 = vpack.c.b16 %v568, %v568
        %v577 = vpack.c.b16 %v569, %v569
        %586 = vst [vmem:[%s309] sm:$0xf] %v570
        %587 = vst [vmem:[%s309 + $0x4] sm:$0xf] %v571
        %588 = vst [vmem:[%s309 + $0x8] sm:$0xf] %v572
        %589 = vst [vmem:[%s309 + $0xc] sm:$0xf] %v573
        %590 = vst [vmem:[%s309 + $0x10] sm:$0xf] %v574
        %591 = vst [vmem:[%s309 + $0x14] sm:$0xf] %v575
        %592 = vst [vmem:[%s309 + $0x18] sm:$0xf] %v576
        %593 = vst [vmem:[%s309 + $0x1c] sm:$0xf] %v577
        %v594 = vadd.f32 %v546, %v547
        %v595 = vadd.f32 %v594, %v548
        %v596 = vadd.f32 %v595, %v549
        %v597 = vadd.f32 %v596, %v550
        %v598 = vadd.f32 %v597, %v551
        %v599 = vadd.f32 %v598, %v552
        %v600 = vadd.f32 %v599, %v553
        %v601 = vrot.slane %v600, 4
        %v602 = vadd.f32 %v600, %v601
        %v603 = vrot.slane %v602, 2
        %v604 = vadd.f32 %v602, %v603
        %v605 = vrot.slane %v604, 1
        %v606 = vadd.f32 %v604, %v605
        // Predicated region
        $region53: #{tpu_custom_call.1} parent=35 // pred_check
          %p607 = pneg %p320
        $region54: #{tpu_custom_call.1} parent=35 // pred_check_branch
          %609 = sbr.rel (%p607) target = $region56
        $region55: #{tpu_custom_call.1} parent=35 // pred_region
          %610 = vst [vmem:[%s315] sm:$0x1] %v606
        $region56: #{tpu_custom_call.1} parent=35 // pred_fallthru
          _
        %p611 = scmp.ne.s32.totalorder %s35, 0
        // Predicated region
        $region57: #{tpu_custom_call.1} parent=35 // pred_check
          %p612 = pneg %p611
        $region58: #{tpu_custom_call.1} parent=35 // pred_check_branch
          %614 = sbr.rel (%p612) target = $region60
        $region59: #{tpu_custom_call.1} parent=35 // pred_region
          %v615 = vld [vmem:[%s315] sm:$0x1]
          %v616 = vadd.f32 %v615, %v606
          %617 = vst [vmem:[%s315] sm:$0x1] %v616
        $region60: #{tpu_custom_call.1} parent=35 // pred_fallthru
          _
        %s618 = sand.u32 %s150, 1
        %s619 = scalar_lea.sflag [#allocation6], %s618
        %s620 = sand.u32 %s150, 1
        %s621 = smul.addr %s620, 32
        %s622 = scalar_lea.vmem [#allocation9], %s621
        %s623 = sand.u32 %s176, 1
        %s624 = scalar_lea.sflag [#allocation11], %s623
        %s625 = sand.u32 %s176, 1
        %s626 = scalar_lea.vmem [#allocation10], %s625
        // Predicated region
        $region61: #{tpu_custom_call.1} parent=35 // pred_check
          %p627 = pneg %p160
        $region62: #{tpu_custom_call.1} parent=35 // pred_check_branch
          %629 = sbr.rel (%p627) target = $region64
        $region63: #{tpu_custom_call.1} parent=35 // pred_region
          %s630 = smul.u32 8, %s35
          %s632 = ssub.s32 512, 512
          %633 = vsyncadd %s619, %s632
          %s634 = smul.addr %s34, 8
          %s635 = sadd.s32 %s630, %s634
          %s636 = smul.addr %s635, 64
          %s637 = scalar_lea.hbm %s5, %s636
          %s638 = sshll.u32 %s622, 4
          %s639 = int_to_ptr.vmem [resolvable:$true] %s638
          %644 = dma.vmem_to_hbm [thread:$0]  %s639, 512, %s637, %s619, 64, 64, 4
        $region64: #{tpu_custom_call.1} parent=35 // pred_fallthru
          _
        // Predicated region
        $region65: #{tpu_custom_call.1} parent=35 // pred_check
          %p645 = pneg %p186
        $region66: #{tpu_custom_call.1} parent=35 // pred_check_branch
          %647 = sbr.rel (%p645) target = $region68
        $region67: #{tpu_custom_call.1} parent=35 // pred_region
          %s649 = ssub.s32 16, 16
          %650 = vsyncadd %s624, %s649
          %s651 = smul.addr %s34, 16
          %s652 = scalar_lea.hbm %s6, %s651
          %s654 = sshll.u32 %s626, 4
          %s655 = int_to_ptr.vmem [resolvable:$true] %s654
          %657 = dma.vmem_to_hbm [thread:$0]  %s655, 16, %s652, %s624
        $region68: #{tpu_custom_call.1} parent=35 // pred_fallthru
          _
      $region36: #{tpu_custom_call.1} parent=5 // pred_fallthru
        _
      %p658 = scmp.le.s32.totalorder 2, %s25
      // Predicated region
      $region69: #{tpu_custom_call.1} parent=5 // pred_check
        %p659 = pneg %p658
      $region70: #{tpu_custom_call.1} parent=5 // pred_check_branch
        %661 = sbr.rel (%p659) target = $region72
      $region71: #{tpu_custom_call.1} parent=5 // pred_region
        %s662 = ssub.s32 %s25, 2
        // Predicated region
        $region73: #{tpu_custom_call.1} parent=71 // pred_check
          %p663 = pneg %p166
        $region74: #{tpu_custom_call.1} parent=71 // pred_check_branch
          %665 = sbr.rel (%p663) target = $region76
        $region75: #{tpu_custom_call.1} parent=71 // pred_region
          %s666 = sand.u32 %s151, 1
          %s667 = scalar_lea.sflag [#allocation6], %s666
          %s668 = sand.u32 %s151, 1
          %s669 = smul.addr %s668, 32
          %s670 = scalar_lea.vmem [#allocation9], %s669
          %671 = dma.done %s667, 512
        $region76: #{tpu_custom_call.1} parent=71 // pred_fallthru
          _
        // Predicated region
        $region77: #{tpu_custom_call.1} parent=71 // pred_check
          %p672 = pneg %p192
        $region78: #{tpu_custom_call.1} parent=71 // pred_check_branch
          %674 = sbr.rel (%p672) target = $region80
        $region79: #{tpu_custom_call.1} parent=71 // pred_region
          %s675 = sand.u32 %s177, 1
          %s676 = scalar_lea.sflag [#allocation11], %s675
          %s677 = sand.u32 %s177, 1
          %s678 = scalar_lea.vmem [#allocation10], %s677
          %679 = dma.done %s676, 16
        $region80: #{tpu_custom_call.1} parent=71 // pred_fallthru
          _
      $region72: #{tpu_custom_call.1} parent=5 // pred_fallthru
        _
    $region6: #{tpu_custom_call.1} parent=1 // loop_footer
      %s29 = sadd.s32 1, %s25
    $region7: #{tpu_custom_call.1} parent=1 // loop_footer_branch
      %24 = sbr.rel target = $region3
    $region8: #{tpu_custom_call.1} parent=1 // loop_exit
      _
    %680 = vsyncpa [#allocation5], 1
    %s681 = scalar_lea.sflag [#allocation5], 1
    %682 = vsyncpa %s681, 1
    %683 = vsyncpa [#allocation8], 1
    %s684 = scalar_lea.sflag [#allocation8], 1
    %685 = vsyncpa %s684, 1
    %686 = vsyncpa [#allocation6], 1
    %s687 = scalar_lea.sflag [#allocation6], 1
    %688 = vsyncpa %s687, 1
    %689 = vsyncpa [#allocation11], 1
    %s690 = scalar_lea.sflag [#allocation11], 1
    %691 = vsyncpa %s690, 1
  %692 = vsyncmov [#allocation3]
  %s693 = vpop.sfrf %692
  %p694 = scmp.eq.s32.totalorder %s693, 0
  %p695 = pneg %p694
  %697 = shalt.err (%p695)

</llo_original>
